<compile_context>
chip_gen: v6e
topology: v6e:2x2x1
jax: 0.10.0
libtpu: 0.0.40
codegen_flags: <defaults>
</compile_context>

<pallas_src>
import jax
import jax.numpy as jnp
from jax.experimental import pallas as pl
from jax.experimental.pallas import tpu as pltpu

LANE = 128


def _round_up(a, b):
    return (a + b - 1) // b * b


def encoder_kernel(xp_ref, w1_ref, b1_ref, w2_ref, b2_ref, w3_ref, b3_ref, o_ref):
    # conv1 (k=4, s=4) as a patch matmul on the MXU + bias + relu.
    x = xp_ref[...]                                               # (TM, C*4)
    h1 = jnp.dot(x, w1_ref[...], preferred_element_type=jnp.float32)
    h1 = jnp.maximum(h1 + b1_ref[...], 0.0)                       # (TM, F2p)

    # conv2: 1x1 conv == channel matmul (MXU) + bias + relu.
    h2 = jnp.dot(h1, w2_ref[...], preferred_element_type=jnp.float32)
    h2 = jnp.maximum(h2 + b2_ref[...], 0.0)                       # (TM, F1p)

    # conv3 has a single output channel: VPU multiply + lane (XLU) reduction
    # instead of a wasteful N=1 MXU matmul.
    h3 = jnp.sum(h2 * w3_ref[...], axis=-1, keepdims=True)        # (TM, 1)

    # Transpose to the lane-dense (1, TM) row *first*, then do bias + tanh
    # there (TM/128 vregs through EUP/VALU instead of TM/8 on the column).
    row = jnp.transpose(h3, (1, 0))                               # (1, TM)
    tm = row.shape[-1]
    o_ref[...] = jnp.tanh(row + b3_ref[0]).reshape(1, 1, tm)


def pack_params(params):
    """Pad/transpose weights once — hoisted out of the per-call path."""
    w1, b1, w2, b2, w3, b3 = params
    F2, C, K = w1.shape           # (2F, C_in, 4)
    F1 = w2.shape[0]              # F
    CK = C * K
    # NOTE: if the config ever grows to F2 >= 128, padding to 256 better fills
    # the 2x256^2 MXUs on v6e/v7x; at F <= 32 the MXU is idle either way.
    F2p = _round_up(F2, LANE)
    F1p = _round_up(F1, LANE)

    w1t = jnp.zeros((CK, F2p), jnp.float32).at[:, :F2].set(w1.reshape(F2, CK).T)
    b1r = jnp.zeros((1, F2p), jnp.float32).at[:, :F2].set(b1.reshape(1, F2))
    w2t = jnp.zeros((F2p, F1p), jnp.float32).at[:F2, :F1].set(w2.reshape(F1, F2).T)
    b2r = jnp.zeros((1, F1p), jnp.float32).at[:, :F1].set(b2.reshape(1, F1))
    w3r = jnp.zeros((1, F1p), jnp.float32).at[:, :F1].set(w3.reshape(1, F1))
    b3s = b3.reshape(1).astype(jnp.float32)
    return (w1t, b1r, w2t, b2r, w3r, b3s)


def encoder_forward(x, packed_params, *, tile_m=2048):
    """x: (B, C_in, L) float32, NCL layout like PyTorch Conv1d."""
    w1t, b1r, w2t, b2r, w3r, b3s = packed_params
    B, C, L = x.shape
    K = 4                      # kernel == stride of c1
    Lo = L // K                # floor, matches PyTorch Conv1d
    CK = C * K
    F2p = w1t.shape[1]
    F1p = w2t.shape[1]

    # Patch extraction (single XLA relayout): rows = (batch, time), cols = (chan, tap).
    # TODO(synk): for very large L, fuse this relayout into the producer of x
    # (or read (1, C, TT*4) NCL blocks and split the 4 taps in-kernel) to cut
    # the extra HBM read+write — the op is HBM-bound.
    xp = (x[:, :, :Lo * K]
          .reshape(B, C, Lo, K)
          .transpose(0, 2, 1, 3)
          .reshape(B * Lo, CK))

    M = B * Lo
    tile_m = _round_up(max(tile_m, LANE), LANE)    # lane-aligned tile request

    if M <= 2 * LANE:
        # Tiny problem: one block covering all rows.
        TM = _round_up(M, 8)
    else:
        # Big tiles (low grid-step overhead, wide lane-dense stores), but cap
        # so the grid has >= 2 steps — both v7x TensorCores get work.
        TM = min(tile_m, _round_up(-(-M // 2), LANE))
    G = -(-M // TM)        # cdiv; last block may be partial (no host-side pad)

    const2 = lambda shape: pl.BlockSpec(shape, lambda i: (0, 0))

    out = pl.pallas_call(
        encoder_kernel,
        out_shape=jax.ShapeDtypeStruct((G, 1, TM), jnp.float32),
        grid_spec=pltpu.PrefetchScalarGridSpec(
            num_scalar_prefetch=0,
            grid=(G,),
            in_specs=[
                pl.BlockSpec((TM, CK), lambda i: (i, 0)),            # xp, pipelined over rows
                const2((CK, F2p)), const2((1, F2p)),                 # w1, b1 (VMEM-resident)
                const2((F2p, F1p)), const2((1, F1p)),                # w2, b2
                const2((1, F1p)),                                    # w3 row
                pl.BlockSpec(memory_space=pltpu.MemorySpace.SMEM),   # b3 scalar
            ],
            out_specs=pl.BlockSpec((1, 1, TM), lambda i: (i, 0, 0)),
        ),
        compiler_params=pltpu.CompilerParams(
            dimension_semantics=("parallel",),
            vmem_limit_bytes=32 * 1024 * 1024,
        ),
    )(xp, w1t, b1r, w2t, b2r, w3r, b3s)

    # (G, 1, TM) -> flat rows -> drop tail padding -> PyTorch layout (B, 1, Lo)
    return out.reshape(G * TM)[:M].reshape(B, Lo)[:, None, :]


def reference_forward(x, params):
    """Pure-JAX reference implementing the conv definitions directly."""
    w1, b1, w2, b2, w3, b3 = params
    B, C, L = x.shape
    Lo = L // 4
    hp = jax.lax.Precision.HIGHEST
    xw = x[:, :, :Lo * 4].reshape(B, C, Lo, 4)
    y1 = jnp.einsum("bclk,ock->bol", xw, w1, precision=hp) + b1[None, :, None]
    y1 = jnp.maximum(y1, 0.0)
    y2 = jnp.einsum("bcl,oc->bol", y1, w2[:, :, 0], precision=hp) + b2[None, :, None]
    y2 = jnp.maximum(y2, 0.0)
    y3 = jnp.einsum("bcl,oc->bol", y2, w3[:, :, 0], precision=hp) + b3[None, :, None]
    return jnp.tanh(y3)


def init_params(key, c_in, final_output_size):
    F = final_output_size
    ks = jax.random.split(key, 6)

    def u(k, shape, fan_in):
        bound = 1.0 / jnp.sqrt(fan_in)
        return jax.random.uniform(k, shape, jnp.float32, -bound, bound)

    w1 = u(ks[0], (2 * F, c_in, 4), c_in * 4)
    b1 = u(ks[1], (2 * F,), c_in * 4)
    w2 = u(ks[2], (F, 2 * F, 1), 2 * F)
    b2 = u(ks[3], (F,), 2 * F)
    w3 = u(ks[4], (1, F, 1), F)
    b3 = u(ks[5], (1,), F)
    return (w1, b1, w2, b2, w3, b3)


if __name__ == "__main__":
    key = jax.random.PRNGKey(0)
    kx, kp = jax.random.split(key)

    B, C_in, L = 2, 4, 64          # input_shape = (4, 64)
    F = 16                         # final_output_size

    x = jax.random.normal(kx, (B, C_in, L), dtype=jnp.float32)
    params = init_params(kp, C_in, F)

    packed = pack_params(params)          # weight packing hoisted: done once
    fwd = jax.jit(encoder_forward)
    out = jax.block_until_ready(fwd(x, packed))

    ref = reference_forward(x, params)
    assert out.shape == (B, 1, L // 4), out.shape
    assert jnp.allclose(out, ref, atol=2e-5, rtol=2e-5), float(jnp.max(jnp.abs(out - ref)))

    print("KERNEL_OK")
</pallas_src>

<mosaic_0001>
module attributes {stable_mosaic.version = 11 : i64} {
  func.func @encoder_kernel(%arg0: i32, %arg1: memref<32x16xf32, #tpu.memory_space<vmem>>, %arg2: memref<16x128xf32, #tpu.memory_space<vmem>>, %arg3: memref<1x128xf32, #tpu.memory_space<vmem>>, %arg4: memref<128x128xf32, #tpu.memory_space<vmem>>, %arg5: memref<1x128xf32, #tpu.memory_space<vmem>>, %arg6: memref<1x128xf32, #tpu.memory_space<vmem>>, %arg7: memref<1xf32, #tpu.memory_space<smem>>, %arg8: memref<1x1x32xf32, #tpu.memory_space<vmem>>) attributes {dimension_semantics = [#tpu.dimension_semantics<parallel>], iteration_bounds = array<i64: 1>, scalar_prefetch = 0 : i64, scratch_operands = 0 : i64, tpu.core_type = #tpu.core_type<tc>, window_params = [{transform_indices = @transform_0, window_bounds = array<i64: 32, 16>}, {pipeline_mode = #tpu.pipeline_mode<synchronous>, transform_indices = @transform_1, window_bounds = array<i64: 16, 128>}, {pipeline_mode = #tpu.pipeline_mode<synchronous>, transform_indices = @transform_2, window_bounds = array<i64: 1, 128>}, {pipeline_mode = #tpu.pipeline_mode<synchronous>, transform_indices = @transform_3, window_bounds = array<i64: 128, 128>}, {pipeline_mode = #tpu.pipeline_mode<synchronous>, transform_indices = @transform_4, window_bounds = array<i64: 1, 128>}, {pipeline_mode = #tpu.pipeline_mode<synchronous>, transform_indices = @transform_5, window_bounds = array<i64: 1, 128>}, {transform_indices = @transform_6, window_bounds = array<i64: 1>}, {transform_indices = @transform_7, window_bounds = array<i64: 1, 1, 32>}]} {
    %c0 = arith.constant 0 : index
    %c0_0 = arith.constant 0 : index
    %0 = vector.load %arg1[%c0, %c0_0] : memref<32x16xf32, #tpu.memory_space<vmem>>, vector<32x16xf32>
    %c0_1 = arith.constant 0 : index
    %c0_2 = arith.constant 0 : index
    %1 = vector.load %arg2[%c0_1, %c0_2] : memref<16x128xf32, #tpu.memory_space<vmem>>, vector<16x128xf32>
    %cst = arith.constant dense<0.000000e+00> : vector<32x128xf32>
    %2 = tpu.matmul %0, %1, %cst {dimension_numbers = #tpu.dot_dimension_numbers<[1], [0], [0], [1], [0, 0, 1, 1], [], []>} : vector<32x16xf32>, vector<16x128xf32>, vector<32x128xf32> -> vector<32x128xf32>
    %c0_3 = arith.constant 0 : index
    %c0_4 = arith.constant 0 : index
    %3 = vector.load %arg3[%c0_3, %c0_4] : memref<1x128xf32, #tpu.memory_space<vmem>>, vector<1x128xf32>
    %4 = vector.broadcast %3 : vector<1x128xf32> to vector<32x128xf32>
    %5 = arith.addf %2, %4 : vector<32x128xf32>
    %cst_5 = arith.constant 0.000000e+00 : f32
    %6 = vector.broadcast %cst_5 : f32 to vector<32x128xf32>
    %7 = arith.maximumf %5, %6 : vector<32x128xf32>
    %c0_6 = arith.constant 0 : index
    %c0_7 = arith.constant 0 : index
    %8 = vector.load %arg4[%c0_6, %c0_7] : memref<128x128xf32, #tpu.memory_space<vmem>>, vector<128x128xf32>
    %cst_8 = arith.constant dense<0.000000e+00> : vector<32x128xf32>
    %9 = tpu.matmul %7, %8, %cst_8 {dimension_numbers = #tpu.dot_dimension_numbers<[1], [0], [0], [1], [0, 0, 1, 1], [], []>} : vector<32x128xf32>, vector<128x128xf32>, vector<32x128xf32> -> vector<32x128xf32>
    %c0_9 = arith.constant 0 : index
    %c0_10 = arith.constant 0 : index
    %10 = vector.load %arg5[%c0_9, %c0_10] : memref<1x128xf32, #tpu.memory_space<vmem>>, vector<1x128xf32>
    %11 = vector.broadcast %10 : vector<1x128xf32> to vector<32x128xf32>
    %12 = arith.addf %9, %11 : vector<32x128xf32>
    %cst_11 = arith.constant 0.000000e+00 : f32
    %13 = vector.broadcast %cst_11 : f32 to vector<32x128xf32>
    %14 = arith.maximumf %12, %13 : vector<32x128xf32>
    %c0_12 = arith.constant 0 : index
    %c0_13 = arith.constant 0 : index
    %15 = vector.load %arg6[%c0_12, %c0_13] : memref<1x128xf32, #tpu.memory_space<vmem>>, vector<1x128xf32>
    %16 = vector.broadcast %15 : vector<1x128xf32> to vector<32x128xf32>
    %17 = arith.mulf %14, %16 : vector<32x128xf32>
    %cst_14 = arith.constant dense<0.000000e+00> : vector<32xf32>
    %18 = vector.multi_reduction <add>, %17, %cst_14 [1] : vector<32x128xf32> to vector<32xf32>
    %19 = vector.shape_cast %18 : vector<32xf32> to vector<32x1xf32>
    %20 = tpu.transpose %19, [1, 0] : vector<32x1xf32> -> vector<1x32xf32>
    %c0_15 = arith.constant 0 : index
    %21 = memref.load %arg7[%c0_15] : memref<1xf32, #tpu.memory_space<smem>>
    %22 = vector.broadcast %21 : f32 to vector<1x32xf32>
    %23 = arith.addf %20, %22 : vector<1x32xf32>
    %24 = math.tanh %23 : vector<1x32xf32>
    %25 = vector.shape_cast %24 : vector<1x32xf32> to vector<1x1x32xf32>
    %c0_16 = arith.constant 0 : index
    %c0_17 = arith.constant 0 : index
    %c0_18 = arith.constant 0 : index
    %26 = vector.load %arg8[%c0_16, %c0_17, %c0_18] : memref<1x1x32xf32, #tpu.memory_space<vmem>>, vector<1x1x32xf32>
    tpu.vector_store %arg8[%c0_16, %c0_17, %c0_18], %25 {strides = array<i32>} : memref<1x1x32xf32, #tpu.memory_space<vmem>>, vector<1x1x32xf32>,
    return
  }
  func.func @transform_0(%arg0: i32) -> (i32, i32) {
    %c0_i32 = arith.constant 0 : i32
    %c0_i32_0 = arith.constant 0 : i32
    return %arg0, %c0_i32 : i32, i32
  }
  func.func @transform_1(%arg0: i32) -> (i32, i32) {
    %c0_i32 = arith.constant 0 : i32
    %c0_i32_0 = arith.constant 0 : i32
    %c0_i32_1 = arith.constant 0 : i32
    return %c0_i32, %c0_i32_0 : i32, i32
  }
  func.func @transform_2(%arg0: i32) -> (i32, i32) {
    %c0_i32 = arith.constant 0 : i32
    %c0_i32_0 = arith.constant 0 : i32
    %c0_i32_1 = arith.constant 0 : i32
    return %c0_i32, %c0_i32_0 : i32, i32
  }
  func.func @transform_3(%arg0: i32) -> (i32, i32) {
    %c0_i32 = arith.constant 0 : i32
    %c0_i32_0 = arith.constant 0 : i32
    %c0_i32_1 = arith.constant 0 : i32
    return %c0_i32, %c0_i32_0 : i32, i32
  }
  func.func @transform_4(%arg0: i32) -> (i32, i32) {
    %c0_i32 = arith.constant 0 : i32
    %c0_i32_0 = arith.constant 0 : i32
    %c0_i32_1 = arith.constant 0 : i32
    return %c0_i32, %c0_i32_0 : i32, i32
  }
  func.func @transform_5(%arg0: i32) -> (i32, i32) {
    %c0_i32 = arith.constant 0 : i32
    %c0_i32_0 = arith.constant 0 : i32
    %c0_i32_1 = arith.constant 0 : i32
    return %c0_i32, %c0_i32_0 : i32, i32
  }
  func.func @transform_6(%arg0: i32) -> i32 {
    %c0_i32 = arith.constant 0 : i32
    %c0_i32_0 = arith.constant 0 : i32
    return %c0_i32 : i32
  }
  func.func @transform_7(%arg0: i32) -> (i32, i32, i32) {
    %c0_i32 = arith.constant 0 : i32
    %c0_i32_0 = arith.constant 0 : i32
    %c0_i32_1 = arith.constant 0 : i32
    return %arg0, %c0_i32, %c0_i32_0 : i32, i32, i32
  }
}

</mosaic_0001>

<llo_original>
// kernel: encoder_forward.1
$region0: #{encoder_forward.1}
  #allocation0 [shape = 'u32[]', space=smem, size = 0x4, offset = 0x4, fixed_abs, tag = 'smem constant byte address 0x4 - core index']
  #allocation1 [shape = 'u32[144,128]{1,0:T(1,128)}', space=vmem, size = 0x12000, scoped, tag = 'internal scratch']
  #allocation2 [shape = 'f32[1]{0:T(128)S(6)}', space=smem, size = 0x200, scoped, tag = 'scoped memory for encoder_forward.1']
  %s0 = inlined_call_operand.vmem [shape: f32[32,16], index: 0, kind: input, shape index: {}]
  %s1 = inlined_call_operand.vmem [shape: f32[16,128], index: 1, kind: input, shape index: {}]
  %s2 = inlined_call_operand.vmem [shape: f32[1,128], index: 2, kind: input, shape index: {}]
  %s3 = inlined_call_operand.vmem [shape: f32[128,128], index: 3, kind: input, shape index: {}]
  %s4 = inlined_call_operand.vmem [shape: f32[1,128], index: 4, kind: input, shape index: {}]
  %s5 = inlined_call_operand.vmem [shape: f32[1,128], index: 5, kind: input, shape index: {}]
  %s6 = inlined_call_operand.<no memory space> [shape: f32[1], index: 6, kind: input, shape index: {}]
  %s7 = inlined_call_operand.vmem [shape: f32[1,1,32], index: 7, kind: output, shape index: {}]
  %s8 = sld [smem:[#allocation0]]
  $region38: #{encoder_forward.1} parent=0
    _
  %s10 = ssub.s32 1, %s8
  %s11 = scalar_select 0, %s10, %s8
  %12 = sst [smem:[#allocation2]] %s6
  // Predicated region
  $region2: #{encoder_forward.1} parent=0 // pred_check
    _
  $region3: #{encoder_forward.1} parent=0 // pred_check_branch
    %14 = sbr.rel (0) target = $region5
  $region4: #{encoder_forward.1} parent=0 // pred_region
    _
  $region5: #{encoder_forward.1} parent=0 // pred_fallthru
    _
  // Predicated region
  $region6: #{encoder_forward.1} parent=0 // pred_check
    _
  $region7: #{encoder_forward.1} parent=0 // pred_check_branch
    %16 = sbr.rel (0) target = $region9
  $region8: #{encoder_forward.1} parent=0 // pred_region
    _
  $region9: #{encoder_forward.1} parent=0 // pred_fallthru
    _
  // Predicated region
  $region10: #{encoder_forward.1} parent=0 // pred_check
    _
  $region11: #{encoder_forward.1} parent=0 // pred_check_branch
    %18 = sbr.rel (0) target = $region13
  $region12: #{encoder_forward.1} parent=0 // pred_region
    _
  $region13: #{encoder_forward.1} parent=0 // pred_fallthru
    _
  // Predicated region
  $region14: #{encoder_forward.1} parent=0 // pred_check
    _
  $region15: #{encoder_forward.1} parent=0 // pred_check_branch
    %20 = sbr.rel (0) target = $region17
  $region16: #{encoder_forward.1} parent=0 // pred_region
    _
  $region17: #{encoder_forward.1} parent=0 // pred_fallthru
    _
  // Predicated region
  $region18: #{encoder_forward.1} parent=0 // pred_check
    _
  $region19: #{encoder_forward.1} parent=0 // pred_check_branch
    %22 = sbr.rel (0) target = $region21
  $region20: #{encoder_forward.1} parent=0 // pred_region
    _
  $region21: #{encoder_forward.1} parent=0 // pred_fallthru
    _
  // Predicated region
  $region22: #{encoder_forward.1} parent=0 // pred_check
    _
  $region23: #{encoder_forward.1} parent=0 // pred_check_branch
    %24 = sbr.rel (0) target = $region25
  $region24: #{encoder_forward.1} parent=0 // pred_region
    _
  $region25: #{encoder_forward.1} parent=0 // pred_fallthru
    _
  // Predicated region
  $region26: #{encoder_forward.1} parent=0 // pred_check
    _
  $region27: #{encoder_forward.1} parent=0 // pred_check_branch
    %26 = sbr.rel (0) target = $region29
  $region28: #{encoder_forward.1} parent=0 // pred_region
    _
  $region29: #{encoder_forward.1} parent=0 // pred_fallthru
    _
  %v27 = vld [vmem:[%s0] sm:$0xff]
  %v28 = vld [vmem:[%s0 + $0x8] sm:$0xff]
  %v29 = vld [vmem:[%s0 + $0x10] sm:$0xff]
  %v30 = vld [vmem:[%s0 + $0x18] sm:$0xff]
  %v31 = vld [vmem:[%s1] sm:$0xff]
  %v32 = vld [vmem:[%s1 + $0x8] sm:$0xff]
  %v33 = vld [vmem:[%s2] sm:$0x1]
  %v35 = vlaneseq
  %v36 = vshrl.u32 %v35, 7
  %v37 = vsub.s32 0, %v36
  %v38 = vrot.slane %v33, %v37
  %vm40 = vcmask 130048
  %v42 = vsel %vm40, %v27, 0
  %v45 = vsel %vm40, %v28, 0
  %v48 = vsel %vm40, %v29, 0
  %v51 = vsel %vm40, %v30, 0
  %53 = vmatprep.subr.mxu0 0.0
  %54 = vmatpush1.msra.mxu0 0.0
  %55 = vmatprep.subr.mxu0 0.0
  %56 = vmatpush1.msra.mxu0 0.0
  %57 = vmatprep.subr.mxu0 0.0
  %58 = vmatpush1.msra.mxu0 0.0
  %59 = vmatprep.subr.mxu0 0.0
  %60 = vmatpush1.msra.mxu0 0.0
  %61 = vmatprep.subr.mxu0 0.0
  %62 = vmatpush1.msra.mxu0 0.0
  %63 = vmatprep.subr.mxu0 0.0
  %64 = vmatpush1.msra.mxu0 0.0
  %65 = vmatprep.subr.mxu0 0.0
  %66 = vmatpush1.msra.mxu0 0.0
  %67 = vmatprep.subr.mxu0 0.0
  %68 = vmatpush1.msra.mxu0 0.0
  %69 = vmatprep.subr.mxu0 0.0
  %70 = vmatpush1.msra.mxu0 0.0
  %71 = vmatprep.subr.mxu0 0.0
  %72 = vmatpush1.msra.mxu0 0.0
  %73 = vmatprep.subr.mxu0 0.0
  %74 = vmatpush1.msra.mxu0 0.0
  %75 = vmatprep.subr.mxu0 0.0
  %76 = vmatpush1.msra.mxu0 0.0
  %77 = vmatprep.subr.mxu0 0.0
  %78 = vmatpush1.msra.mxu0 0.0
  %79 = vmatprep.subr.mxu0 0.0
  %80 = vmatpush1.msra.mxu0 0.0
  %81 = vmatprep.subr.mxu0 0.0
  %82 = vmatpush1.msra.mxu0 %v32
  %83 = vmatprep.subr.mxu0 0.0
  %84 = vmatpush1.msra.mxu0 %v31
  %85 = vmatprep.subr.mxu0 0.0
  %86 = vmatpush2.msra.mxu0 0.0
  %87 = vmatprep.subr.mxu0 0.0
  %88 = vmatpush2.msra.mxu0 0.0
  %89 = vmatprep.subr.mxu0 0.0
  %90 = vmatpush2.msra.mxu0 0.0
  %91 = vmatprep.subr.mxu0 0.0
  %92 = vmatpush2.msra.mxu0 0.0
  %93 = vmatprep.subr.mxu0 0.0
  %94 = vmatpush2.msra.mxu0 0.0
  %95 = vmatprep.subr.mxu0 0.0
  %96 = vmatpush2.msra.mxu0 0.0
  %97 = vmatprep.subr.mxu0 0.0
  %98 = vmatpush2.msra.mxu0 0.0
  %99 = vmatprep.subr.mxu0 0.0
  %100 = vmatpush2.msra.mxu0 0.0
  %101 = vmatprep.subr.mxu0 0.0
  %102 = vmatpush2.msra.mxu0 0.0
  %103 = vmatprep.subr.mxu0 0.0
  %104 = vmatpush2.msra.mxu0 0.0
  %105 = vmatprep.subr.mxu0 0.0
  %106 = vmatpush2.msra.mxu0 0.0
  %107 = vmatprep.subr.mxu0 0.0
  %108 = vmatpush2.msra.mxu0 0.0
  %109 = vmatprep.subr.mxu0 0.0
  %110 = vmatpush2.msra.mxu0 0.0
  %111 = vmatprep.subr.mxu0 0.0
  %112 = vmatpush2.msra.mxu0 0.0
  %113 = vmatprep.subr.mxu0 0.0
  %114 = vmatpush2.msra.mxu0 0.0
  %115 = vmatprep.subr.mxu0 0.0
  %116 = vmatpush2.msra.mxu0 0.0
  %117 = vmatprep.mubr.f32.mxu0 0.0
  %118 = vmatmul.mubr.f32.gmra.mxu0 %v42
  %v119 = vpop.f32.mrf.mxu0
  %v120 = vadd.f32 %v38, %v119
  %v121 = vpop.f32.mrf.mxu0
  %122 = vmatprep.mubr.f32.mxu0 0.0
  %123 = vmatmul.mubr.f32.gmra.mxu0 %v45
  %v124 = vpop.f32.mrf.mxu0
  %v125 = vadd.f32 %v38, %v124
  %v126 = vpop.f32.mrf.mxu0
  %127 = vmatprep.mubr.f32.mxu0 0.0
  %128 = vmatmul.mubr.f32.gmra.mxu0 %v48
  %v129 = vpop.f32.mrf.mxu0
  %v130 = vadd.f32 %v38, %v129
  %v131 = vpop.f32.mrf.mxu0
  %132 = vmatprep.mubr.f32.mxu0 0.0
  %133 = vmatmul.mubr.f32.gmra.mxu0 %v51
  %v134 = vpop.f32.mrf.mxu0
  %v135 = vadd.f32 %v38, %v134
  %v136 = vpop.f32.mrf.mxu0
  %137 = vdwg.mxu0
  %v138 = vmax.f32 %v120, 0.0
  %v139 = vmax.f32 %v125, 0.0
  %v140 = vmax.f32 %v130, 0.0
  %v141 = vmax.f32 %v135, 0.0
  %v142 = vld [vmem:[%s3] sm:$0xff]
  %v143 = vld [vmem:[%s3 + $0x8] sm:$0xff]
  %v144 = vld [vmem:[%s3 + $0x10] sm:$0xff]
  %v145 = vld [vmem:[%s3 + $0x18] sm:$0xff]
  %v146 = vld [vmem:[%s3 + $0x20] sm:$0xff]
  %v147 = vld [vmem:[%s3 + $0x28] sm:$0xff]
  %v148 = vld [vmem:[%s3 + $0x30] sm:$0xff]
  %v149 = vld [vmem:[%s3 + $0x38] sm:$0xff]
  %v150 = vld [vmem:[%s3 + $0x40] sm:$0xff]
  %v151 = vld [vmem:[%s3 + $0x48] sm:$0xff]
  %v152 = vld [vmem:[%s3 + $0x50] sm:$0xff]
  %v153 = vld [vmem:[%s3 + $0x58] sm:$0xff]
  %v154 = vld [vmem:[%s3 + $0x60] sm:$0xff]
  %v155 = vld [vmem:[%s3 + $0x68] sm:$0xff]
  %v156 = vld [vmem:[%s3 + $0x70] sm:$0xff]
  %v157 = vld [vmem:[%s3 + $0x78] sm:$0xff]
  %v158 = vld [vmem:[%s4] sm:$0x1]
  %v160 = vlaneseq
  %v161 = vshrl.u32 %v160, 7
  %v162 = vsub.s32 0, %v161
  %v163 = vrot.slane %v158, %v162
  %165 = vmatprep.subr.mxu0 0.0
  %166 = vmatpush1.msra.mxu0 %v157
  %167 = vmatprep.subr.mxu0 0.0
  %168 = vmatpush1.msra.mxu0 %v156
  %169 = vmatprep.subr.mxu0 0.0
  %170 = vmatpush1.msra.mxu0 %v155
  %171 = vmatprep.subr.mxu0 0.0
  %172 = vmatpush1.msra.mxu0 %v154
  %173 = vmatprep.subr.mxu0 0.0
  %174 = vmatpush1.msra.mxu0 %v153
  %175 = vmatprep.subr.mxu0 0.0
  %176 = vmatpush1.msra.mxu0 %v152
  %177 = vmatprep.subr.mxu0 0.0
  %178 = vmatpush1.msra.mxu0 %v151
  %179 = vmatprep.subr.mxu0 0.0
  %180 = vmatpush1.msra.mxu0 %v150
  %181 = vmatprep.subr.mxu0 0.0
  %182 = vmatpush1.msra.mxu0 %v149
  %183 = vmatprep.subr.mxu0 0.0
  %184 = vmatpush1.msra.mxu0 %v148
  %185 = vmatprep.subr.mxu0 0.0
  %186 = vmatpush1.msra.mxu0 %v147
  %187 = vmatprep.subr.mxu0 0.0
  %188 = vmatpush1.msra.mxu0 %v146
  %189 = vmatprep.subr.mxu0 0.0
  %190 = vmatpush1.msra.mxu0 %v145
  %191 = vmatprep.subr.mxu0 0.0
  %192 = vmatpush1.msra.mxu0 %v144
  %193 = vmatprep.subr.mxu0 0.0
  %194 = vmatpush1.msra.mxu0 %v143
  %195 = vmatprep.subr.mxu0 0.0
  %196 = vmatpush1.msra.mxu0 %v142
  %197 = vmatprep.subr.mxu0 0.0
  %198 = vmatpush2.msra.mxu0 0.0
  %199 = vmatprep.subr.mxu0 0.0
  %200 = vmatpush2.msra.mxu0 0.0
  %201 = vmatprep.subr.mxu0 0.0
  %202 = vmatpush2.msra.mxu0 0.0
  %203 = vmatprep.subr.mxu0 0.0
  %204 = vmatpush2.msra.mxu0 0.0
  %205 = vmatprep.subr.mxu0 0.0
  %206 = vmatpush2.msra.mxu0 0.0
  %207 = vmatprep.subr.mxu0 0.0
  %208 = vmatpush2.msra.mxu0 0.0
  %209 = vmatprep.subr.mxu0 0.0
  %210 = vmatpush2.msra.mxu0 0.0
  %211 = vmatprep.subr.mxu0 0.0
  %212 = vmatpush2.msra.mxu0 0.0
  %213 = vmatprep.subr.mxu0 0.0
  %214 = vmatpush2.msra.mxu0 0.0
  %215 = vmatprep.subr.mxu0 0.0
  %216 = vmatpush2.msra.mxu0 0.0
  %217 = vmatprep.subr.mxu0 0.0
  %218 = vmatpush2.msra.mxu0 0.0
  %219 = vmatprep.subr.mxu0 0.0
  %220 = vmatpush2.msra.mxu0 0.0
  %221 = vmatprep.subr.mxu0 0.0
  %222 = vmatpush2.msra.mxu0 0.0
  %223 = vmatprep.subr.mxu0 0.0
  %224 = vmatpush2.msra.mxu0 0.0
  %225 = vmatprep.subr.mxu0 0.0
  %226 = vmatpush2.msra.mxu0 0.0
  %227 = vmatprep.subr.mxu0 0.0
  %228 = vmatpush2.msra.mxu0 0.0
  %229 = vmatprep.mubr.f32.mxu0 0.0
  %230 = vmatmul.mubr.f32.gmra.mxu0 %v138
  %v231 = vpop.f32.mrf.mxu0
  %v232 = vadd.f32 %v163, %v231
  %v233 = vpop.f32.mrf.mxu0
  %234 = vmatprep.mubr.f32.mxu0 0.0
  %235 = vmatmul.mubr.f32.gmra.mxu0 %v139
  %v236 = vpop.f32.mrf.mxu0
  %v237 = vadd.f32 %v163, %v236
  %v238 = vpop.f32.mrf.mxu0
  %239 = vmatprep.mubr.f32.mxu0 0.0
  %240 = vmatmul.mubr.f32.gmra.mxu0 %v140
  %v241 = vpop.f32.mrf.mxu0
  %v242 = vadd.f32 %v163, %v241
  %v243 = vpop.f32.mrf.mxu0
  %244 = vmatprep.mubr.f32.mxu0 0.0
  %245 = vmatmul.mubr.f32.gmra.mxu0 %v141
  %v246 = vpop.f32.mrf.mxu0
  %v247 = vadd.f32 %v163, %v246
  %v248 = vpop.f32.mrf.mxu0
  %249 = vdwg.mxu0
  %v250 = vmax.f32 %v232, 0.0
  %v251 = vmax.f32 %v237, 0.0
  %v252 = vmax.f32 %v242, 0.0
  %v253 = vmax.f32 %v247, 0.0
  %v254 = vld [vmem:[%s5] sm:$0x1]
  %v256 = vlaneseq
  %v257 = vshrl.u32 %v256, 7
  %v258 = vsub.s32 0, %v257
  %v259 = vrot.slane %v254, %v258
  %v261 = vmul.f32 %v250, %v259
  %v262 = vmul.f32 %v251, %v259
  %v263 = vmul.f32 %v252, %v259
  %v264 = vmul.f32 %v253, %v259
  %265 = vadd.xlane.f32.xlu0 %v261
  %v266 = vpop.xlane.xlu0 %265
  %267 = vadd.xlane.f32.xlu0 %v262
  %v268 = vpop.xlane.xlu0 %267
  %269 = vadd.xlane.f32.xlu0 %v263
  %v270 = vpop.xlane.xlu0 %269
  %271 = vadd.xlane.f32.xlu0 %v264
  %v272 = vpop.xlane.xlu0 %271
  %273 = vxpose.xlu0.b32.start [1/16] %v266, 128
  %274 = vxpose.xlu0.b32.cont [2/16] %v268, 128
  %275 = vxpose.xlu0.b32.cont [3/16] %v270, 128
  %276 = vxpose.xlu0.b32.cont [4/16] %v272, 128
  %277 = vxpose.xlu0.b32.cont [5/16] 0.0, 128
  %278 = vxpose.xlu0.b32.cont [6/16] 0.0, 128
  %279 = vxpose.xlu0.b32.cont [7/16] 0.0, 128
  %280 = vxpose.xlu0.b32.cont [8/16] 0.0, 128
  %281 = vxpose.xlu0.b32.cont [9/16] 0.0, 128
  %282 = vxpose.xlu0.b32.cont [10/16] 0.0, 128
  %283 = vxpose.xlu0.b32.cont [11/16] 0.0, 128
  %284 = vxpose.xlu0.b32.cont [12/16] 0.0, 128
  %285 = vxpose.xlu0.b32.cont [13/16] 0.0, 128
  %286 = vxpose.xlu0.b32.cont [14/16] 0.0, 128
  %287 = vxpose.xlu0.b32.cont [15/16] 0.0, 128
  %288 = vxpose.xlu0.b32.end [16/16] 0.0, 128
  %v289 = vpop.trf.xlu0
  %v290 = vpop.trf.xlu0
  %v291 = vpop.trf.xlu0
  %v292 = vpop.trf.xlu0
  %v293 = vpop.trf.xlu0
  %v294 = vpop.trf.xlu0
  %v295 = vpop.trf.xlu0
  %v296 = vpop.trf.xlu0
  %v297 = vpop.trf.xlu0
  %v298 = vpop.trf.xlu0
  %v299 = vpop.trf.xlu0
  %v300 = vpop.trf.xlu0
  %v301 = vpop.trf.xlu0
  %v302 = vpop.trf.xlu0
  %v303 = vpop.trf.xlu0
  %v304 = vpop.trf.xlu0
  %s305 = sld [smem:[#allocation2]]
  %v306 = vstv %s305
  %v307 = vadd.f32 %v289, %v306
  %v308 = vtanh.pop %v307
  %vm309 = vcmask 253952
  %310 = vst.msk [vmem:[%s7] sm:$0x1] %vm309, %v308
  // Predicated region
  $region30: #{encoder_forward.1} parent=0 // pred_check
    _
  $region31: #{encoder_forward.1} parent=0 // pred_check_branch
    %312 = sbr.rel (0) target = $region33
  $region32: #{encoder_forward.1} parent=0 // pred_region
    _
  $region33: #{encoder_forward.1} parent=0 // pred_fallthru
    _
  // Predicated region
  $region34: #{encoder_forward.1} parent=0 // pred_check
    _
  $region35: #{encoder_forward.1} parent=0 // pred_check_branch
    %314 = sbr.rel (0) target = $region37
  $region36: #{encoder_forward.1} parent=0 // pred_region
    _
  $region37: #{encoder_forward.1} parent=0 // pred_fallthru
    _

</llo_original>
